<compile_context>
chip_gen: v6e
topology: v6e:2x2x1
jax: 0.10.0
libtpu: 0.0.40
codegen_flags: <defaults>
</compile_context>

<pallas_src>
import math
import functools

import jax
import jax.numpy as jnp
from jax import lax
from jax.experimental import pallas as pl
from jax.experimental.pallas import tpu as pltpu

# Scoped-VMEM budget: above the 16/32 MiB scoped defaults (v5e / v6e+v7x),
# below v7x's 64 MiB physical VMEM so double-buffering stays intact.
_VMEM_LIMIT_BYTES = 48 * 1024 * 1024


def _qkv_proj_kernel(x_ref, w_ref, b_ref, o_ref):
    """One (batch, t_tile) grid step: lane-dense (tt, C) @ (C, 3C) projection.

    x_ref: (tt, C)  compute dtype
    w_ref: (C, 3C)  compute dtype (resident; Q columns pre-scaled by 1/sqrt(D))
    b_ref: (1, 3C)  float32        (Q portion pre-scaled by 1/sqrt(D))
    o_ref: (tt, 3C) compute dtype
    """
    o_ref[...] = (jnp.dot(x_ref[...], w_ref[...],
                          preferred_element_type=jnp.float32)
                  + b_ref[...]).astype(o_ref.dtype)


def _flash_attn_proj_kernel(q_ref, k_ref, v_ref, wp_ref, bp_ref, o_ref,
                            m_ref, l_ref, acc_ref, *, approx_recip: bool):
    """One (batch, q_tile, kv_tile) grid step, all heads processed together.

    q_ref:   (H, tq, D) compute dtype (pre-scaled by 1/sqrt(D))
    k_ref:   (H, tk, D) compute dtype
    v_ref:   (H, tk, D) compute dtype
    wp_ref:  (C, C)     compute dtype (resident)
    bp_ref:  (1, C)     float32      (resident)
    o_ref:   (tq, C)    written on the last kv tile
    m_ref:   (H, tq, 1) f32 running row max
    l_ref:   (H, tq, 1) f32 running softmax denominator
    acc_ref: (H, tq, D) f32 unnormalized PV accumulator
    """
    i = pl.program_id(1)          # query-tile index
    j = pl.program_id(2)          # kv-tile index (innermost, "arbitrary")
    H, tq, D = q_ref.shape
    tk = k_ref.shape[1]
    C = wp_ref.shape[0]

    @pl.when(j == 0)
    def _init():
        m_ref[...] = jnp.full_like(m_ref, -1e30)
        l_ref[...] = jnp.zeros_like(l_ref)
        acc_ref[...] = jnp.zeros_like(acc_ref)

    # Causal block skipping: kv tile j (columns [j*tk, (j+1)*tk)) contributes
    # to q tile i (rows [i*tq, (i+1)*tq)) iff its first column <= last row.
    @pl.when(j * tk < (i + 1) * tq)
    def _compute():
        q = q_ref[...]
        k = k_ref[...]
        v = v_ref[...]
        cdt = q.dtype

        # Batched-over-heads scores; feature axes contracted directly.
        s = jnp.einsum('hqd,hkd->hqk', q, k,
                       preferred_element_type=jnp.float32)     # (H, tq, tk)

        # Causal mask with a large finite negative (no -inf - -inf hazard).
        # No-op on fully-below-diagonal tiles; applied unconditionally inside
        # the computed branch for simplicity.
        row = i * tq + lax.broadcasted_iota(jnp.int32, (H, tq, tk), 1)
        col = j * tk + lax.broadcasted_iota(jnp.int32, (H, tq, tk), 2)
        s = jnp.where(col <= row, s, jnp.float32(-1e30))

        # Online softmax update.
        m_prev = m_ref[...]
        m_new = jnp.maximum(m_prev, jnp.max(s, axis=-1, keepdims=True))
        alpha = jnp.exp(m_prev - m_new)
        p = jnp.exp(s - m_new)                                  # (H, tq, tk) f32
        l_ref[...] = alpha * l_ref[...] + jnp.sum(p, axis=-1, keepdims=True)
        pv = jnp.einsum('hqk,hkd->hqd', p.astype(cdt), v,
                        preferred_element_type=jnp.float32)     # (H, tq, D)
        acc_ref[...] = alpha * acc_ref[...] + pv
        m_ref[...] = m_new

    @pl.when(j == pl.num_programs(2) - 1)
    def _finalize():
        inv = pl.reciprocal(l_ref[...], approx=approx_recip)    # (H, tq, 1)
        y = (acc_ref[...] * inv).astype(q_ref.dtype)            # (H, tq, D)
        # Fused output projection: per-head lane-dense (tq, D) @ (D, C) dots,
        # accumulated within this single finalize (no per-head RMW grid passes).
        out = jnp.dot(y[0], wp_ref[0:D, :],
                      preferred_element_type=jnp.float32)       # (tq, C)
        for h in range(1, H):                                   # static loop
            out = out + jnp.dot(y[h], wp_ref[h * D:(h + 1) * D, :],
                                preferred_element_type=jnp.float32)
        o_ref[...] = (out + bp_ref[...]).astype(o_ref.dtype)


def self_attention_pallas(x, w_qkv, b_qkv, w_proj, b_proj, n_head: int,
                          compute_dtype=jnp.bfloat16,
                          tq=None, tk=None, tt=None):
    """Fused causal multi-head self-attention. x: (B, T, C) -> (B, T, C)."""
    B, T, C = x.shape
    assert C % n_head == 0
    D = C // n_head
    scale = 1.0 / math.sqrt(D)

    if tq is None:
        tq = min(T, 256)
    if tk is None:
        tk = min(T, 512)
    if tt is None:
        tt = min(T, 256)
    assert T % tq == 0 and T % tk == 0 and T % tt == 0

    # Fold 1/sqrt(D) into the Q columns of the QKV weights/bias (trace-time).
    col_scale = jnp.concatenate([jnp.full((C,), scale, jnp.float32),
                                 jnp.ones((2 * C,), jnp.float32)])
    w_qkv_s = (w_qkv * col_scale[None, :]).astype(compute_dtype)        # (C, 3C)
    b_qkv_s = (b_qkv.reshape(1, 3 * C) * col_scale[None, :]).astype(jnp.float32)

    x_c = x.astype(compute_dtype)

    # --- Phase 1: lane-dense QKV projection (MXU N = 3C) --------------------
    qkv = pl.pallas_call(
        _qkv_proj_kernel,
        out_shape=jax.ShapeDtypeStruct((B, T, 3 * C), compute_dtype),
        grid_spec=pltpu.PrefetchScalarGridSpec(
            num_scalar_prefetch=0,
            grid=(B, T // tt),
            in_specs=[
                pl.BlockSpec((None, tt, C), lambda b, t: (b, t, 0)),     # x
                pl.BlockSpec((C, 3 * C), lambda b, t: (0, 0)),           # W (resident)
                pl.BlockSpec((1, 3 * C), lambda b, t: (0, 0)),           # b (resident)
            ],
            out_specs=pl.BlockSpec((None, tt, 3 * C), lambda b, t: (b, t, 0)),
        ),
        compiler_params=pltpu.CompilerParams(
            dimension_semantics=("parallel", "parallel"),
            vmem_limit_bytes=_VMEM_LIMIT_BYTES),
    )(x_c, w_qkv_s, b_qkv_s)

    # Head-major (B, H, T, D) slabs — layout plumbing left to XLA.
    q, k, v = jnp.split(qkv, 3, axis=-1)

    def heads(t):
        return t.reshape(B, T, n_head, D).transpose(0, 2, 1, 3)

    qh, kh, vh = heads(q), heads(k), heads(v)

    wproj_c = w_proj.astype(compute_dtype)
    bproj2d = b_proj.reshape(1, C).astype(jnp.float32)

    kernel = functools.partial(
        _flash_attn_proj_kernel,
        approx_recip=(compute_dtype != jnp.float32))

    # --- Phase 2: flash attention + fused output projection -----------------
    return pl.pallas_call(
        kernel,
        out_shape=jax.ShapeDtypeStruct((B, T, C), x.dtype),
        grid_spec=pltpu.PrefetchScalarGridSpec(
            num_scalar_prefetch=0,
            grid=(B, T // tq, T // tk),           # kv axis innermost = accum
            in_specs=[
                pl.BlockSpec((None, n_head, tq, D), lambda b, i, j: (b, 0, i, 0)),
                pl.BlockSpec((None, n_head, tk, D), lambda b, i, j: (b, 0, j, 0)),
                pl.BlockSpec((None, n_head, tk, D), lambda b, i, j: (b, 0, j, 0)),
                pl.BlockSpec((C, C), lambda b, i, j: (0, 0)),            # W_proj (resident)
                pl.BlockSpec((1, C), lambda b, i, j: (0, 0)),            # b_proj (resident)
            ],
            out_specs=pl.BlockSpec((None, tq, C), lambda b, i, j: (b, i, 0)),
            scratch_shapes=[
                pltpu.VMEM((n_head, tq, 1), jnp.float32),   # m
                pltpu.VMEM((n_head, tq, 1), jnp.float32),   # l
                pltpu.VMEM((n_head, tq, D), jnp.float32),   # acc
            ],
        ),
        compiler_params=pltpu.CompilerParams(
            dimension_semantics=("parallel", "parallel", "arbitrary"),
            vmem_limit_bytes=_VMEM_LIMIT_BYTES),
    )(qh, kh, vh, wproj_c, bproj2d)


def self_attention_reference(x, w_qkv, b_qkv, w_proj, b_proj, n_head: int):
    """Pure-JAX reference mirroring the PyTorch forward (eval mode)."""
    B, T, C = x.shape
    D = C // n_head
    qkv = jnp.einsum("btc,cd->btd", x, w_qkv) + b_qkv[0]
    q, k, v = jnp.split(qkv, 3, axis=-1)
    q = q.reshape(B, T, n_head, D).transpose(0, 2, 1, 3)
    k = k.reshape(B, T, n_head, D).transpose(0, 2, 1, 3)
    v = v.reshape(B, T, n_head, D).transpose(0, 2, 1, 3)
    att = jnp.einsum("bhtd,bhsd->bhts", q, k) / math.sqrt(D)
    mask = jnp.tril(jnp.ones((T, T), dtype=bool))
    att = jnp.where(mask, att, -jnp.inf)
    att = jax.nn.softmax(att, axis=-1)
    y = jnp.einsum("bhts,bhsd->bhtd", att, v)
    y = y.transpose(0, 2, 1, 3).reshape(B, T, C)
    return jnp.einsum("btc,cd->btd", y, w_proj) + b_proj[0]


if __name__ == "__main__":
    # Small config consistent with the module: n_embd=32, n_head=4, bias=True,
    # dropout=0 (eval), block_size >= T. T=16 so the explicit tq=tk=8 run
    # exercises multi-tile online softmax + causal block skipping.
    B, T, C, n_head = 2, 16, 32, 4

    key = jax.random.PRNGKey(0)
    kx, k1, k2, k3, k4 = jax.random.split(key, 5)

    x = jax.random.normal(kx, (B, T, C), dtype=jnp.float32)

    bound = 1.0 / math.sqrt(C)
    w_qkv = jax.random.uniform(k1, (C, 3 * C), jnp.float32, -bound, bound)
    b_qkv = jax.random.uniform(k2, (1, 3 * C), jnp.float32, -bound, bound)
    w_proj = jax.random.uniform(k3, (C, C), jnp.float32, -bound, bound)
    b_proj = jax.random.uniform(k4, (1, C), jnp.float32, -bound, bound)

    ref = self_attention_reference(x, w_qkv, b_qkv, w_proj, b_proj, n_head)

    # f32, multi-tile flash path (2x2 q/kv tiles, one above-diagonal skip).
    out_f32_tiled = self_attention_pallas(
        x, w_qkv, b_qkv, w_proj, b_proj, n_head,
        compute_dtype=jnp.float32, tq=8, tk=8)
    out_f32_tiled = jax.block_until_ready(out_f32_tiled)
    assert out_f32_tiled.shape == (B, T, C)
    assert jnp.allclose(out_f32_tiled, ref, atol=1e-4, rtol=1e-4), (
        float(jnp.max(jnp.abs(out_f32_tiled - ref))))

    # f32, single-tile path (default tile sizes).
    out_f32 = self_attention_pallas(x, w_qkv, b_qkv, w_proj, b_proj, n_head,
                                    compute_dtype=jnp.float32)
    out_f32 = jax.block_until_ready(out_f32)
    assert jnp.allclose(out_f32, ref, atol=1e-4, rtol=1e-4), (
        float(jnp.max(jnp.abs(out_f32 - ref))))

    # bf16 MXU-operand path (the v6e/v7x performance configuration), tiled.
    out_bf16 = self_attention_pallas(x, w_qkv, b_qkv, w_proj, b_proj, n_head,
                                     compute_dtype=jnp.bfloat16, tq=8, tk=8)
    out_bf16 = jax.block_until_ready(out_bf16)
    assert out_bf16.shape == (B, T, C)
    assert jnp.allclose(out_bf16, ref, atol=5e-2, rtol=5e-2), (
        float(jnp.max(jnp.abs(out_bf16 - ref))))

    print("KERNEL_OK")
</pallas_src>

<mosaic_0001>
module attributes {stable_mosaic.version = 11 : i64} {
  func.func @_qkv_proj_kernel(%arg0: i32, %arg1: i32, %arg2: memref<1x16x32xf32, #tpu.memory_space<vmem>>, %arg3: memref<32x96xf32, #tpu.memory_space<vmem>>, %arg4: memref<1x96xf32, #tpu.memory_space<vmem>>, %arg5: memref<1x16x96xf32, #tpu.memory_space<vmem>>) attributes {dimension_semantics = [#tpu.dimension_semantics<parallel>, #tpu.dimension_semantics<parallel>], iteration_bounds = array<i64: 2, 1>, scalar_prefetch = 0 : i64, scratch_operands = 0 : i64, tpu.core_type = #tpu.core_type<tc>, window_params = [{transform_indices = @transform_0, window_bounds = array<i64: 1, 16, 32>}, {pipeline_mode = #tpu.pipeline_mode<synchronous>, transform_indices = @transform_1, window_bounds = array<i64: 32, 96>}, {pipeline_mode = #tpu.pipeline_mode<synchronous>, transform_indices = @transform_2, window_bounds = array<i64: 1, 96>}, {transform_indices = @transform_3, window_bounds = array<i64: 1, 16, 96>}]} {
    %c0 = arith.constant 0 : index
    %c0_0 = arith.constant 0 : index
    %c0_1 = arith.constant 0 : index
    %0 = vector.load %arg2[%c0, %c0_0, %c0_1] : memref<1x16x32xf32, #tpu.memory_space<vmem>>, vector<1x16x32xf32>
    %1 = vector.shape_cast %0 : vector<1x16x32xf32> to vector<16x32xf32>
    %c0_2 = arith.constant 0 : index
    %c0_3 = arith.constant 0 : index
    %2 = vector.load %arg3[%c0_2, %c0_3] : memref<32x96xf32, #tpu.memory_space<vmem>>, vector<32x96xf32>
    %cst = arith.constant dense<0.000000e+00> : vector<16x96xf32>
    %3 = tpu.matmul %1, %2, %cst {dimension_numbers = #tpu.dot_dimension_numbers<[1], [0], [0], [1], [0, 0, 1, 1], [], []>} : vector<16x32xf32>, vector<32x96xf32>, vector<16x96xf32> -> vector<16x96xf32>
    %c0_4 = arith.constant 0 : index
    %c0_5 = arith.constant 0 : index
    %4 = vector.load %arg4[%c0_4, %c0_5] : memref<1x96xf32, #tpu.memory_space<vmem>>, vector<1x96xf32>
    %5 = vector.broadcast %4 : vector<1x96xf32> to vector<16x96xf32>
    %6 = arith.addf %3, %5 : vector<16x96xf32>
    %c0_6 = arith.constant 0 : index
    %c0_7 = arith.constant 0 : index
    %c0_8 = arith.constant 0 : index
    %7 = vector.load %arg5[%c0_6, %c0_7, %c0_8] : memref<1x16x96xf32, #tpu.memory_space<vmem>>, vector<1x16x96xf32>
    %8 = vector.shape_cast %7 : vector<1x16x96xf32> to vector<16x96xf32>
    %9 = vector.shape_cast %6 : vector<16x96xf32> to vector<1x16x96xf32>
    tpu.vector_store %arg5[%c0_6, %c0_7, %c0_8], %9 {strides = array<i32>} : memref<1x16x96xf32, #tpu.memory_space<vmem>>, vector<1x16x96xf32>,
    return
  }
  func.func @transform_0(%arg0: i32, %arg1: i32) -> (i32, i32, i32) {
    %c0_i32 = arith.constant 0 : i32
    %c0_i32_0 = arith.constant 0 : i32
    return %arg0, %arg1, %c0_i32 : i32, i32, i32
  }
  func.func @transform_1(%arg0: i32, %arg1: i32) -> (i32, i32) {
    %c0_i32 = arith.constant 0 : i32
    %c0_i32_0 = arith.constant 0 : i32
    %c0_i32_1 = arith.constant 0 : i32
    return %c0_i32, %c0_i32_0 : i32, i32
  }
  func.func @transform_2(%arg0: i32, %arg1: i32) -> (i32, i32) {
    %c0_i32 = arith.constant 0 : i32
    %c0_i32_0 = arith.constant 0 : i32
    %c0_i32_1 = arith.constant 0 : i32
    return %c0_i32, %c0_i32_0 : i32, i32
  }
  func.func @transform_3(%arg0: i32, %arg1: i32) -> (i32, i32, i32) {
    %c0_i32 = arith.constant 0 : i32
    %c0_i32_0 = arith.constant 0 : i32
    return %arg0, %arg1, %c0_i32 : i32, i32, i32
  }
}

</mosaic_0001>

<llo_original>
// kernel: tpu_custom_call.1
$region0: #{tpu_custom_call.1}
  #allocation0 [shape = 'u32[]', space=smem, size = 0x4, offset = 0x4, fixed_abs, tag = 'smem constant byte address 0x4 - core index']
  #allocation1 [shape = 'u32[144,128]{1,0:T(1,128)}', space=vmem, size = 0x12000, scoped, tag = 'internal scratch']
  %s0 = inlined_call_operand.hbm [shape: f32[2,16,32], index: 0, kind: input, shape index: {}]
  %s1 = inlined_call_operand.hbm [shape: f32[32,96], index: 1, kind: input, shape index: {}]
  %s2 = inlined_call_operand.vmem [shape: f32[1,96], index: 2, kind: input, shape index: {}]
  %s3 = inlined_call_operand.hbm [shape: f32[2,16,96], index: 3, kind: output, shape index: {}]
  %s4 = sld [smem:[#allocation0]]
  $region53: #{tpu_custom_call.1} parent=0
    _
  %s6 = ssub.s32 1, %s4
  %s7 = scalar_select 0, %s6, %s4
  $region1: #{tpu_custom_call.1} parent=0
    #allocation2 [shape = 'u8[16384]{0}', space=vmem, size = 0x4000, scoped, tag = 'input window, operand 0']
    #allocation3 [shape = 's32[2]{0}', space=sflag, size = 0x8, scoped, tag = 'scoped memory for tpu_custom_call.1']
    #allocation4 [shape = 's32[2]{0}', space=sflag, size = 0x8, scoped, tag = 'scoped memory for tpu_custom_call.1']
    #allocation5 [shape = 'u8[16384]{0}', space=vmem, size = 0x4000, scoped, tag = 'input window, operand 1, single buffered']
    #allocation6 [shape = 's32[1]{0}', space=sflag, size = 0x4, scoped, tag = 'scoped memory for tpu_custom_call.1']
    #allocation7 [shape = 'u8[16384]{0}', space=vmem, size = 0x4000, scoped, tag = 'output window, operand 0']
    %8 = vsyncpa [#allocation3], 0
    %s9 = scalar_lea.sflag [#allocation3], 1
    %10 = vsyncpa %s9, 0
    %11 = vsyncpa [#allocation6], 0
    %12 = vsyncpa [#allocation4], 0
    %s13 = scalar_lea.sflag [#allocation4], 1
    %14 = vsyncpa %s13, 0
    loop: start=0, step=1, limit=4
    $region2: #{tpu_custom_call.1} parent=1 // loop_pre_header
      _
    $region3: #{tpu_custom_call.1} parent=1 // loop_header
      %s16 = sphi 0, %s20
      %p17 = scmp.ge.s32.totalorder %s16, 4
      %s23 = sphi 0, %s35
      %s24 = sphi 0, %s31
      %s25 = sphi 0, %s23
      %s26 = sphi 0, %s24
      %s27 = sphi 0, %s25
      %s28 = sphi 0, %s26
      %s40 = sphi 0, %s42
      %s43 = sphi 0, %s40
      %s44 = sphi 0, %s43
      %s60 = sphi 0, %s44
      %s64 = sphi 0, %s64
      %s66 = sphi 0, %s64
      %s67 = sphi 0, %s66
      %s81 = sphi 0, %s67
      %s85 = sphi 0, %s85
      %s87 = sphi 0, %s85
      %s88 = sphi 0, %s87
      %s102 = sphi 0, %s88
      %s110 = sphi 0, %s112
      %s113 = sphi 0, %s110
      %s114 = sphi 0, %s113
      %s130 = sphi 0, %s114
    $region4: #{tpu_custom_call.1} parent=1 // loop_header_branch
      %19 = sbr.rel (%p17) target = $region8
    $region5: #{tpu_custom_call.1} parent=1 // loop_body
      %s21 = ssub.s32 %s16, 1
      %s22 = ssub.s32 %s16, 2
      %s29 = sadd.s32 1, %s24
      %p30 = scmp.ge.s32.totalorder %s29, 1
      %s31 = scalar_select %p30, 0, %s29
      %s32 = sadd.s32 1, %s23
      %s33 = scalar_select %p30, %s32, %s23
      %p34 = scmp.ge.s32.totalorder %s33, 2
      %s35 = scalar_select %p34, 0, %s33
      %s36 = ssub.s32 %s23, %s35
      %s37 = ssub.s32 %s24, %s31
      %s38 = sor.u32 %s36, %s37
      %p39 = scmp.eq.s32.totalorder %s38, 0
      %s41 = sadd.s32 %s40, 1
      %s42 = scalar_select %p39, %s40, %s41
      %p45 = pneg %p39
      %p46 = scmp.eq.s32.totalorder %s16, 1
      %p47 = por %p45, %p46
      %p48 = scmp.ne.s32.totalorder %s40, %s43
      %p49 = scmp.eq.s32.totalorder %s16, 0
      %p50 = por %p48, %p49
      %p51 = scmp.ne.s32.totalorder %s40, %s43
      %p52 = scmp.eq.s32.totalorder %s21, 1
      %p53 = por %p51, %p52
      %p54 = scmp.ne.s32.totalorder %s43, %s44
      %p55 = scmp.eq.s32.totalorder %s21, 0
      %p56 = por %p54, %p55
      %p57 = scmp.ne.s32.totalorder %s43, %s44
      %p58 = scmp.eq.s32.totalorder %s22, 1
      %p59 = por %p57, %p58
      %p61 = scmp.ne.s32.totalorder %s44, %s60
      %p62 = scmp.eq.s32.totalorder %s22, 0
      %p63 = por %p61, %p62
      %s65 = sadd.s32 %s64, 1
      %p68 = scmp.eq.s32.totalorder %s16, 1
      %p69 = scmp.ne.s32.totalorder %s64, %s66
      %p70 = scmp.eq.s32.totalorder %s16, 0
      %p71 = por %p69, %p70
      %p72 = scmp.ne.s32.totalorder %s64, %s66
      %p73 = scmp.eq.s32.totalorder %s21, 1
      %p74 = por %p72, %p73
      %p75 = scmp.ne.s32.totalorder %s66, %s67
      %p76 = scmp.eq.s32.totalorder %s21, 0
      %p77 = por %p75, %p76
      %p78 = scmp.ne.s32.totalorder %s66, %s67
      %p79 = scmp.eq.s32.totalorder %s22, 1
      %p80 = por %p78, %p79
      %p82 = scmp.ne.s32.totalorder %s67, %s81
      %p83 = scmp.eq.s32.totalorder %s22, 0
      %p84 = por %p82, %p83
      %s86 = sadd.s32 %s85, 1
      %p89 = scmp.eq.s32.totalorder %s16, 1
      %p90 = scmp.ne.s32.totalorder %s85, %s87
      %p91 = scmp.eq.s32.totalorder %s16, 0
      %p92 = por %p90, %p91
      %p93 = scmp.ne.s32.totalorder %s85, %s87
      %p94 = scmp.eq.s32.totalorder %s21, 1
      %p95 = por %p93, %p94
      %p96 = scmp.ne.s32.totalorder %s87, %s88
      %p97 = scmp.eq.s32.totalorder %s21, 0
      %p98 = por %p96, %p97
      %p99 = scmp.ne.s32.totalorder %s87, %s88
      %p100 = scmp.eq.s32.totalorder %s22, 1
      %p101 = por %p99, %p100
      %p103 = scmp.ne.s32.totalorder %s88, %s102
      %p104 = scmp.eq.s32.totalorder %s22, 0
      %p105 = por %p103, %p104
      %s106 = ssub.s32 %s23, %s35
      %s107 = ssub.s32 %s24, %s31
      %s108 = sor.u32 %s106, %s107
      %p109 = scmp.eq.s32.totalorder %s108, 0
      %s111 = sadd.s32 %s110, 1
      %s112 = scalar_select %p109, %s110, %s111
      %p115 = pneg %p109
      %p116 = scmp.eq.s32.totalorder %s16, 1
      %p117 = por %p115, %p116
      %p118 = scmp.ne.s32.totalorder %s110, %s113
      %p119 = scmp.eq.s32.totalorder %s16, 0
      %p120 = por %p118, %p119
      %p121 = scmp.ne.s32.totalorder %s110, %s113
      %p122 = scmp.eq.s32.totalorder %s21, 1
      %p123 = por %p121, %p122
      %p124 = scmp.ne.s32.totalorder %s113, %s114
      %p125 = scmp.eq.s32.totalorder %s21, 0
      %p126 = por %p124, %p125
      %p127 = scmp.ne.s32.totalorder %s113, %s114
      %p128 = scmp.eq.s32.totalorder %s22, 1
      %p129 = por %p127, %p128
      %p131 = scmp.ne.s32.totalorder %s114, %s130
      %p132 = scmp.eq.s32.totalorder %s22, 0
      %p133 = por %p131, %p132
      %p134 = scmp.le.s32.totalorder 1, %s16
      %p135 = scmp.lt.s32.totalorder %s16, 3
      %p136 = pnand %p134, %p135
      %p137 = pneg %p136
      // Predicated region
      $region9: #{tpu_custom_call.1} parent=5 // pred_check
        _
      $region10: #{tpu_custom_call.1} parent=5 // pred_check_branch
        %139 = sbr.rel (%p136) target = $region12
      $region11: #{tpu_custom_call.1} parent=5 // pred_region
        %s140 = ssub.s32 %s16, 1
        // Predicated region
        $region13: #{tpu_custom_call.1} parent=11 // pred_check
          %p141 = pneg %p77
        $region14: #{tpu_custom_call.1} parent=11 // pred_check_branch
          %143 = sbr.rel (%p141) target = $region16
        $region15: #{tpu_custom_call.1} parent=11 // pred_region
          %s145 = ssub.s32 512, 512
          %146 = vsyncadd [#allocation6], %s145
          %s147 = sshll.u32 [#allocation5], 4
          %s148 = int_to_ptr.vmem [resolvable:$true] %s147
          %153 = dma.hbm_to_vmem [thread:$0]  %s1, 512, %s148, [#allocation6], 128, 128, 8
        $region16: #{tpu_custom_call.1} parent=11 // pred_fallthru
          _
        // Predicated region
        $region17: #{tpu_custom_call.1} parent=11 // pred_check
          %p154 = pneg %p98
        $region18: #{tpu_custom_call.1} parent=11 // pred_check_branch
          %156 = sbr.rel (%p154) target = $region20
        $region19: #{tpu_custom_call.1} parent=11 // pred_region
          _
        $region20: #{tpu_custom_call.1} parent=11 // pred_fallthru
          _
      $region12: #{tpu_custom_call.1} parent=5 // pred_fallthru
        _
      %p157 = scmp.lt.s32.totalorder %s16, 2
      // Predicated region
      $region21: #{tpu_custom_call.1} parent=5 // pred_check
        %p158 = pneg %p157
      $region22: #{tpu_custom_call.1} parent=5 // pred_check_branch
        %160 = sbr.rel (%p158) target = $region24
      $region23: #{tpu_custom_call.1} parent=5 // pred_region
        // Predicated region
        $region25: #{tpu_custom_call.1} parent=23 // pred_check
          %p161 = pneg %p50
        $region26: #{tpu_custom_call.1} parent=23 // pred_check_branch
          %163 = sbr.rel (%p161) target = $region28
        $region27: #{tpu_custom_call.1} parent=23 // pred_region
          %s164 = sand.u32 %s40, 1
          %s165 = scalar_lea.sflag [#allocation3], %s164
          %s166 = sand.u32 %s40, 1
          %s167 = smul.addr %s166, 16
          %s168 = scalar_lea.vmem [#allocation2], %s167
          %s169 = smul.u32 2, %s24
          %s171 = ssub.s32 256, 256
          %172 = vsyncadd %s165, %s171
          %s173 = smul.addr %s23, 2
          %s174 = sadd.s32 %s169, %s173
          %s175 = smul.addr %s174, 128
          %s176 = scalar_lea.hbm %s0, %s175
          %s177 = sshll.u32 %s168, 4
          %s178 = int_to_ptr.vmem [resolvable:$true] %s177
          %183 = dma.hbm_to_vmem [thread:$0]  %s176, 256, %s178, %s165, 128, 128, 8
        $region28: #{tpu_custom_call.1} parent=23 // pred_fallthru
          _
      $region24: #{tpu_custom_call.1} parent=5 // pred_fallthru
        _
      %p184 = scmp.le.s32.totalorder 1, %s16
      %p185 = scmp.lt.s32.totalorder %s16, 3
      %p186 = pnand %p184, %p185
      %p187 = pneg %p186
      // Predicated region
      $region29: #{tpu_custom_call.1} parent=5 // pred_check
        _
      $region30: #{tpu_custom_call.1} parent=5 // pred_check_branch
        %189 = sbr.rel (%p186) target = $region32
      $region31: #{tpu_custom_call.1} parent=5 // pred_region
        %s190 = ssub.s32 %s16, 1
        %s191 = sand.u32 %s43, 1
        %s192 = scalar_lea.sflag [#allocation3], %s191
        %s193 = sand.u32 %s43, 1
        %s194 = smul.addr %s193, 16
        %s195 = scalar_lea.vmem [#allocation2], %s194
        // Predicated region
        $region33: #{tpu_custom_call.1} parent=31 // pred_check
          %p196 = pneg %p56
        $region34: #{tpu_custom_call.1} parent=31 // pred_check_branch
          %198 = sbr.rel (%p196) target = $region36
        $region35: #{tpu_custom_call.1} parent=31 // pred_region
          %199 = dma.done %s192, 256
        $region36: #{tpu_custom_call.1} parent=31 // pred_fallthru
          _
        // Predicated region
        $region37: #{tpu_custom_call.1} parent=31 // pred_check
          %p200 = pneg %p77
        $region38: #{tpu_custom_call.1} parent=31 // pred_check_branch
          %202 = sbr.rel (%p200) target = $region40
        $region39: #{tpu_custom_call.1} parent=31 // pred_region
          %203 = dma.done [#allocation6], 512
        $region40: #{tpu_custom_call.1} parent=31 // pred_fallthru
          _
        %s204 = sand.u32 %s43, 1
        %s205 = scalar_lea.sflag [#allocation3], %s204
        %s206 = sand.u32 %s43, 1
        %s207 = smul.addr %s206, 16
        %s208 = scalar_lea.vmem [#allocation2], %s207
        %p209 = pneg %p56
        %p210 = pneg %p53
        %p211 = pneg %p77
        %p212 = pneg %p74
        %p213 = pneg %p98
        %p214 = pneg %p95
        %p215 = pneg %p126
        %p216 = pneg %p123
        %s217 = sand.u32 %s113, 1
        %s218 = scalar_lea.sflag [#allocation4], %s217
        %s219 = sand.u32 %s113, 1
        %s220 = smul.addr %s219, 16
        %s221 = scalar_lea.vmem [#allocation7], %s220
        %s222 = smul.u32 2, %s26
        %s223 = smul.u32 2, %s26
        %v224 = vld [vmem:[%s195] sm:$0xff]
        %v225 = vld [vmem:[%s195 + $0x8] sm:$0xff]
        %v226 = vld [vmem:[#allocation5] sm:$0xff]
        %v227 = vld [vmem:[#allocation5 + $0x8] sm:$0xff]
        %v228 = vld [vmem:[#allocation5 + $0x10] sm:$0xff]
        %v229 = vld [vmem:[#allocation5 + $0x18] sm:$0xff]
        %v230 = vld [vmem:[%s2] sm:$0x1]
        %v232 = vlaneseq
        %v233 = vshrl.u32 %v232, 7
        %v234 = vsub.s32 0, %v233
        %v235 = vrot.slane %v230, %v234
        %vm237 = vcmask 261120
        %v239 = vsel %vm237, %v224, 0
        %v242 = vsel %vm237, %v225, 0
        %244 = vmatprep.subr.mxu0 0.0
        %245 = vmatpush1.msra.mxu0 0.0
        %246 = vmatprep.subr.mxu0 0.0
        %247 = vmatpush1.msra.mxu0 0.0
        %248 = vmatprep.subr.mxu0 0.0
        %249 = vmatpush1.msra.mxu0 0.0
        %250 = vmatprep.subr.mxu0 0.0
        %251 = vmatpush1.msra.mxu0 0.0
        %252 = vmatprep.subr.mxu0 0.0
        %253 = vmatpush1.msra.mxu0 0.0
        %254 = vmatprep.subr.mxu0 0.0
        %255 = vmatpush1.msra.mxu0 0.0
        %256 = vmatprep.subr.mxu0 0.0
        %257 = vmatpush1.msra.mxu0 0.0
        %258 = vmatprep.subr.mxu0 0.0
        %259 = vmatpush1.msra.mxu0 0.0
        %260 = vmatprep.subr.mxu0 0.0
        %261 = vmatpush1.msra.mxu0 0.0
        %262 = vmatprep.subr.mxu0 0.0
        %263 = vmatpush1.msra.mxu0 0.0
        %264 = vmatprep.subr.mxu0 0.0
        %265 = vmatpush1.msra.mxu0 0.0
        %266 = vmatprep.subr.mxu0 0.0
        %267 = vmatpush1.msra.mxu0 0.0
        %268 = vmatprep.subr.mxu0 0.0
        %269 = vmatpush1.msra.mxu0 %v229
        %270 = vmatprep.subr.mxu0 0.0
        %271 = vmatpush1.msra.mxu0 %v228
        %272 = vmatprep.subr.mxu0 0.0
        %273 = vmatpush1.msra.mxu0 %v227
        %274 = vmatprep.subr.mxu0 0.0
        %275 = vmatpush1.msra.mxu0 %v226
        %276 = vmatprep.subr.mxu0 0.0
        %277 = vmatpush2.msra.mxu0 0.0
        %278 = vmatprep.subr.mxu0 0.0
        %279 = vmatpush2.msra.mxu0 0.0
        %280 = vmatprep.subr.mxu0 0.0
        %281 = vmatpush2.msra.mxu0 0.0
        %282 = vmatprep.subr.mxu0 0.0
        %283 = vmatpush2.msra.mxu0 0.0
        %284 = vmatprep.subr.mxu0 0.0
        %285 = vmatpush2.msra.mxu0 0.0
        %286 = vmatprep.subr.mxu0 0.0
        %287 = vmatpush2.msra.mxu0 0.0
        %288 = vmatprep.subr.mxu0 0.0
        %289 = vmatpush2.msra.mxu0 0.0
        %290 = vmatprep.subr.mxu0 0.0
        %291 = vmatpush2.msra.mxu0 0.0
        %292 = vmatprep.subr.mxu0 0.0
        %293 = vmatpush2.msra.mxu0 0.0
        %294 = vmatprep.subr.mxu0 0.0
        %295 = vmatpush2.msra.mxu0 0.0
        %296 = vmatprep.subr.mxu0 0.0
        %297 = vmatpush2.msra.mxu0 0.0
        %298 = vmatprep.subr.mxu0 0.0
        %299 = vmatpush2.msra.mxu0 0.0
        %300 = vmatprep.subr.mxu0 0.0
        %301 = vmatpush2.msra.mxu0 0.0
        %302 = vmatprep.subr.mxu0 0.0
        %303 = vmatpush2.msra.mxu0 0.0
        %304 = vmatprep.subr.mxu0 0.0
        %305 = vmatpush2.msra.mxu0 0.0
        %306 = vmatprep.subr.mxu0 0.0
        %307 = vmatpush2.msra.mxu0 0.0
        %308 = vmatprep.mubr.f32.mxu0 0.0
        %309 = vmatmul.mubr.f32.gmra.mxu0 %v239
        %v310 = vpop.f32.mrf.mxu0
        %v311 = vadd.f32 %v235, %v310
        %v312 = vpop.f32.mrf.mxu0
        %313 = vmatprep.mubr.f32.mxu0 0.0
        %314 = vmatmul.mubr.f32.gmra.mxu0 %v242
        %v315 = vpop.f32.mrf.mxu0
        %v316 = vadd.f32 %v235, %v315
        %v317 = vpop.f32.mrf.mxu0
        %318 = vdwg.mxu0
        %vm319 = vcmask 785408
        %320 = vst.msk [vmem:[%s221] sm:$0xff] %vm319, %v311
        %321 = vst.msk [vmem:[%s221 + $0x8] sm:$0xff] %vm319, %v316
        %s322 = sand.u32 %s113, 1
        %s323 = scalar_lea.sflag [#allocation4], %s322
        %s324 = sand.u32 %s113, 1
        %s325 = smul.addr %s324, 16
        %s326 = scalar_lea.vmem [#allocation7], %s325
        // Predicated region
        $region41: #{tpu_custom_call.1} parent=31 // pred_check
          %p327 = pneg %p123
        $region42: #{tpu_custom_call.1} parent=31 // pred_check_branch
          %329 = sbr.rel (%p327) target = $region44
        $region43: #{tpu_custom_call.1} parent=31 // pred_region
          %s330 = smul.u32 2, %s26
          %s332 = ssub.s32 256, 256
          %333 = vsyncadd %s323, %s332
          %s334 = smul.addr %s25, 2
          %s335 = sadd.s32 %s330, %s334
          %s336 = smul.addr %s335, 128
          %s337 = scalar_lea.hbm %s3, %s336
          %s338 = sshll.u32 %s326, 4
          %s339 = int_to_ptr.vmem [resolvable:$true] %s338
          %344 = dma.vmem_to_hbm [thread:$0]  %s339, 256, %s337, %s323, 128, 128, 8
        $region44: #{tpu_custom_call.1} parent=31 // pred_fallthru
          _
      $region32: #{tpu_custom_call.1} parent=5 // pred_fallthru
        _
      %p345 = scmp.le.s32.totalorder 2, %s16
      // Predicated region
      $region45: #{tpu_custom_call.1} parent=5 // pred_check
        %p346 = pneg %p345
      $region46: #{tpu_custom_call.1} parent=5 // pred_check_branch
        %348 = sbr.rel (%p346) target = $region48
      $region47: #{tpu_custom_call.1} parent=5 // pred_region
        %s349 = ssub.s32 %s16, 2
        // Predicated region
        $region49: #{tpu_custom_call.1} parent=47 // pred_check
          %p350 = pneg %p129
        $region50: #{tpu_custom_call.1} parent=47 // pred_check_branch
          %352 = sbr.rel (%p350) target = $region52
        $region51: #{tpu_custom_call.1} parent=47 // pred_region
          %s353 = sand.u32 %s114, 1
          %s354 = scalar_lea.sflag [#allocation4], %s353
          %s355 = sand.u32 %s114, 1
          %s356 = smul.addr %s355, 16
          %s357 = scalar_lea.vmem [#allocation7], %s356
          %358 = dma.done %s354, 256
        $region52: #{tpu_custom_call.1} parent=47 // pred_fallthru
          _
      $region48: #{tpu_custom_call.1} parent=5 // pred_fallthru
        _
    $region6: #{tpu_custom_call.1} parent=1 // loop_footer
      %s20 = sadd.s32 1, %s16
    $region7: #{tpu_custom_call.1} parent=1 // loop_footer_branch
      %15 = sbr.rel target = $region3
    $region8: #{tpu_custom_call.1} parent=1 // loop_exit
      _
    %359 = vsyncpa [#allocation3], 1
    %s360 = scalar_lea.sflag [#allocation3], 1
    %361 = vsyncpa %s360, 1
    %362 = vsyncpa [#allocation6], 1
    %363 = vsyncpa [#allocation4], 1
    %s364 = scalar_lea.sflag [#allocation4], 1
    %365 = vsyncpa %s364, 1

</llo_original>
